<compile_context>
chip_gen: v7x
topology: tpu7x:2x2x1
jax: 0.10.0
libtpu: 0.0.40
codegen_flags: <defaults>
</compile_context>

<pallas_src>
import functools

import jax
import jax.numpy as jnp
from jax import lax
from jax.experimental import pallas as pl
from jax.experimental.pallas import tpu as pltpu

MIN_NORM = 1e-15
ARTANH_EPS = 1e-5          # hyptorch clamps artanh input to (-1+1e-5, 1-1e-5)
_LANES = 128               # TPU vreg lane width
_MAX_BLOCK_ROWS = 2048     # 2048 rows x 128 lanes x 4B = 1 MiB per tile
_VMEM_BUDGET = 8 << 20     # budget for the two double-buffered I/O streams
_VMEM_LIMIT = 32 << 20     # explicit scoped-VMEM request (<= physical on v5e/v6e/v7x)


def _cdiv(a, b):
    return (a + b - 1) // b


def _round_up(a, m):
    return _cdiv(a, m) * m


# ------------------------------ kernel helpers ------------------------------ #
def _artanh_k(z):
    """artanh via one EUP log: 0.5*log1p(2z/(1-z)); z clipped exactly like hyptorch."""
    z = jnp.clip(z, -1.0 + ARTANH_EPS, 1.0 - ARTANH_EPS)
    return 0.5 * jnp.log1p(2.0 * z * pl.reciprocal(1.0 - z, approx=True))


def _seg_matrix_host(pd, d):
    """(pd, pd) block-diagonal 0/1 matrix with d x d blocks of ones (exact in bf16)."""
    idx = jnp.arange(pd) // d
    return (idx[:, None] == idx[None, :]).astype(jnp.bfloat16)


def _seg_sum(t, seg_bf16):
    """Segmented lane sum on the MXU with f32-level accuracy in 2 single-pass bf16 matmuls.

    The 0/1 segment matrix is lossless in bf16, so only the data operand is split into an
    exact bf16 high part plus a bf16 residual; relative error ~2^-18 (better than
    Precision.HIGH) at 1/3 the MXU passes of Precision.HIGHEST.
    """
    t_hi = t.astype(jnp.bfloat16)
    t_lo = (t - t_hi.astype(jnp.float32)).astype(jnp.bfloat16)
    return (jnp.dot(t_hi, seg_bf16, preferred_element_type=jnp.float32)
            + jnp.dot(t_lo, seg_bf16, preferred_element_type=jnp.float32))


def _seg_sum_pair(a, b, seg_bf16):
    """Two segmented sums sharing one MXU weight push (stacked along the sublane axis)."""
    tr = a.shape[0]
    r = _seg_sum(jnp.concatenate([a, b], axis=0), seg_bf16)
    return r[:tr], r[tr:]


# ----------------------------- Pallas kernels ------------------------------ #
def _logmap0_packed_kernel(seg_ref, x_ref, o_ref, *, c):
    """logmap0 with P = 128/d points packed per lane-dense row."""
    x = x_ref[...].astype(jnp.float32)                 # (TR, 128)
    sqrt_c = c ** 0.5
    norm = jnp.maximum(jnp.sqrt(_seg_sum(x * x, seg_ref[...])), MIN_NORM)
    scale = _artanh_k(sqrt_c * norm) * pl.reciprocal(sqrt_c * norm, approx=True)
    o_ref[...] = (x * scale).astype(o_ref.dtype)


def _logmap0_kernel(x_ref, o_ref, *, c):
    """logmap0, lane-dense generic path (D padded to a multiple of 128)."""
    x = x_ref[...].astype(jnp.float32)                 # (TR, Dp)
    sqrt_c = c ** 0.5
    norm = jnp.maximum(jnp.sqrt(jnp.sum(x * x, axis=-1, keepdims=True)), MIN_NORM)
    scale = _artanh_k(sqrt_c * norm) * pl.reciprocal(sqrt_c * norm, approx=True)
    o_ref[...] = (x * scale).astype(o_ref.dtype)


def _logmap_packed_kernel(scal_ref, seg_ref, xp_ref, x_ref, o_ref, *, c):
    """General logmap at xp (train_x=True), lane-packed layout.

    scal_ref (SMEM f32[3]) = [||xp||^2, 1 - c*||xp||^2, 2/(sqrt_c*lambda_xp)]
    seg_ref  (VMEM (128,128) bf16 block-diag 0/1, resident)
    xp_ref   (VMEM (1,128))  = xp replicated once per packed point slot (resident)
    """
    y = x_ref[...].astype(jnp.float32)                 # (TR, 128)
    mx = -xp_ref[...].astype(jnp.float32)              # (1, 128) broadcast row
    sqrt_c = c ** 0.5
    x2 = scal_ref[0]
    b = scal_ref[1]                                    # 1 - c*||xp||^2
    factor = scal_ref[2]

    y2, xy = _seg_sum_pair(y * y, mx * y, seg_ref[...])    # segment-broadcast (TR, 128)

    a = 1.0 + 2.0 * c * xy + c * y2
    denom = jnp.maximum(1.0 + 2.0 * c * xy + (c * c) * x2 * y2, MIN_NORM)
    inv_denom = pl.reciprocal(denom, approx=True)
    sub = (a * mx + b * y) * inv_denom                 # mobius_add(-xp, y, c)

    # ||sub||^2 algebraically (no third segmented reduction); clamp cancellation to >= 0.
    sub_norm2 = jnp.maximum(a * a * x2 + 2.0 * b * (a * xy) + b * b * y2, 0.0)
    sub_norm = jnp.maximum(jnp.sqrt(sub_norm2) * inv_denom, MIN_NORM)

    scale = factor * _artanh_k(sqrt_c * sub_norm) * pl.reciprocal(sub_norm, approx=True)
    o_ref[...] = (sub * scale).astype(o_ref.dtype)


def _logmap_kernel(scal_ref, xp_ref, x_ref, o_ref, *, c):
    """General logmap at xp, lane-dense generic path (D padded to a multiple of 128)."""
    y = x_ref[...].astype(jnp.float32)                 # (TR, Dp)
    mx = -xp_ref[...].astype(jnp.float32)              # (1, Dp)
    sqrt_c = c ** 0.5
    x2 = scal_ref[0]
    b = scal_ref[1]
    factor = scal_ref[2]

    y2 = jnp.sum(y * y, axis=-1, keepdims=True)
    xy = jnp.sum(mx * y, axis=-1, keepdims=True)
    a = 1.0 + 2.0 * c * xy + c * y2
    denom = jnp.maximum(1.0 + 2.0 * c * xy + (c * c) * x2 * y2, MIN_NORM)
    inv_denom = pl.reciprocal(denom, approx=True)
    sub = (a * mx + b * y) * inv_denom

    sub_norm2 = jnp.maximum(a * a * x2 + 2.0 * b * (a * xy) + b * b * y2, 0.0)
    sub_norm = jnp.maximum(jnp.sqrt(sub_norm2) * inv_denom, MIN_NORM)

    scale = factor * _artanh_k(sqrt_c * sub_norm) * pl.reciprocal(sub_norm, approx=True)
    o_ref[...] = (sub * scale).astype(o_ref.dtype)


# ------------------------------ Host wrappers ------------------------------ #
def _plan(d):
    """Lane-dense layout plan: (padded ball dim, points packed per 128-lane row)."""
    if d < _LANES:
        d_pad = 1
        while d_pad < d:
            d_pad *= 2                  # next power of two >= d (divides 128)
        if d_pad < _LANES:
            return d_pad, _LANES // d_pad
        return _LANES, 1
    return _round_up(d, _LANES), 1


def _choose_block_rows(rows, row_bytes):
    """Largest row tile inside the I/O VMEM budget; guarantees >= 2 (even) grid steps for
    medium/large inputs so both v7x TensorCores get work."""
    cap = _VMEM_BUDGET // (2 * 2 * max(row_bytes, 1))       # 2 streams x double buffering
    cap = max(8, min(_MAX_BLOCK_ROWS, (cap // 8) * 8))
    num_tiles = _cdiv(rows, cap)
    if rows >= 16:
        num_tiles = max(2, num_tiles)
    if num_tiles > 1 and num_tiles % 2:
        num_tiles += 1
    return max(8, min(cap, _round_up(_cdiv(rows, num_tiles), 8)))


def _prepare(x, d_pad, p):
    """(N, D) -> lane-dense (rows, p*d_pad).  At most one fused jnp.pad; no row-tile padding
    (the Pallas grid masks the ragged last block)."""
    n, d = x.shape
    rows = _cdiv(n, p)
    pad_n = rows * p - n
    pad_d = d_pad - d
    if pad_n or pad_d:
        x = jnp.pad(x, ((0, pad_n), (0, pad_d)))
    return x.reshape(rows, p * d_pad), rows, bool(pad_n or pad_d)


def _finalize(out, n, d, d_pad, p, padded):
    out = out.reshape(out.shape[0] * p, d_pad)
    if padded:
        out = lax.slice(out, (0, 0), (n, d))   # single contiguous slice
    return out


def _compiler_params():
    return pltpu.CompilerParams(dimension_semantics=("parallel",),
                                vmem_limit_bytes=_VMEM_LIMIT)


def logmap0_pallas(x, c):
    n, d = x.shape
    c = float(c)
    d_pad, p = _plan(d)
    pd = p * d_pad
    xr, rows, padded = _prepare(x, d_pad, p)

    br = _choose_block_rows(rows, pd * xr.dtype.itemsize)
    grid = (_cdiv(rows, br),)
    row_spec = pl.BlockSpec((br, pd), lambda i: (i, 0))

    if p > 1:
        kernel = functools.partial(_logmap0_packed_kernel, c=c)
        in_specs = [pl.BlockSpec((pd, pd), lambda i: (0, 0)), row_spec]
        args = (_seg_matrix_host(pd, d_pad), xr)
    else:
        kernel = functools.partial(_logmap0_kernel, c=c)
        in_specs = [row_spec]
        args = (xr,)

    out = pl.pallas_call(
        kernel,
        out_shape=jax.ShapeDtypeStruct((rows, pd), x.dtype),
        grid_spec=pltpu.PrefetchScalarGridSpec(
            num_scalar_prefetch=0, grid=grid,
            in_specs=in_specs, out_specs=row_spec),
        compiler_params=_compiler_params(),
    )(*args)
    return _finalize(out, n, d, d_pad, p, padded)


def logmap_pallas(xp, x, c):
    n, d = x.shape
    c = float(c)
    sqrt_c = c ** 0.5
    xp = xp.reshape(d).astype(jnp.float32)

    # Hoist xp-dependent scalars out of the per-tile loop (passed via SMEM).
    x2 = jnp.sum(xp * xp)
    one_m_cx2 = 1.0 - c * x2
    factor = jnp.maximum(one_m_cx2, MIN_NORM) / sqrt_c       # == 2 / (sqrt_c * lambda_xp)
    scalars = jnp.stack([x2, one_m_cx2, factor]).astype(jnp.float32)   # (3,)

    d_pad, p = _plan(d)
    pd = p * d_pad
    xr, rows, padded = _prepare(x, d_pad, p)
    xp_pad = jnp.pad(xp, (0, d_pad - d)) if d_pad != d else xp
    xp_row = jnp.tile(xp_pad, (p,)).reshape(1, pd)           # xp replicated per packed slot

    br = _choose_block_rows(rows, pd * xr.dtype.itemsize)
    grid = (_cdiv(rows, br),)
    row_spec = pl.BlockSpec((br, pd), lambda i: (i, 0))
    smem_spec = pl.BlockSpec(memory_space=pltpu.MemorySpace.SMEM)
    xp_spec = pl.BlockSpec((1, pd), lambda i: (0, 0))

    if p > 1:
        kernel = functools.partial(_logmap_packed_kernel, c=c)
        in_specs = [smem_spec, pl.BlockSpec((pd, pd), lambda i: (0, 0)), xp_spec, row_spec]
        args = (scalars, _seg_matrix_host(pd, d_pad), xp_row, xr)
    else:
        kernel = functools.partial(_logmap_kernel, c=c)
        in_specs = [smem_spec, xp_spec, row_spec]
        args = (scalars, xp_row, xr)

    out = pl.pallas_call(
        kernel,
        out_shape=jax.ShapeDtypeStruct((rows, pd), x.dtype),
        grid_spec=pltpu.PrefetchScalarGridSpec(
            num_scalar_prefetch=0, grid=grid,
            in_specs=in_specs, out_specs=row_spec),
        compiler_params=_compiler_params(),
    )(*args)
    return _finalize(out, n, d, d_pad, p, padded)


# Plain-JAX glue only for the tiny D-vector reference point (train_x=True).
def _expmap0(u, c):
    sqrt_c = c ** 0.5
    u_norm = jnp.maximum(jnp.linalg.norm(u, axis=-1, keepdims=True), MIN_NORM)
    return jnp.tanh(sqrt_c * u_norm) * u / (sqrt_c * u_norm)


def _project(x, c):
    norm = jnp.maximum(jnp.linalg.norm(x, axis=-1, keepdims=True), MIN_NORM)
    maxnorm = (1.0 - 1e-3) / (c ** 0.5)
    return jnp.where(norm > maxnorm, x / norm * maxnorm, x)


class FromPoincare:
    """JAX/Pallas port of hyptorch FromPoincare (forward pass)."""

    def __init__(self, curvature: float, train_x: bool = False, ball_dim=None):
        if train_x:
            if ball_dim is None:
                raise ValueError(
                    "if train_x=True, ball_dim has to be integer, got {}".format(ball_dim))
            # nn.Parameter(torch.zeros((ball_dim,))) -> deterministic zeros init
            self.xp = jnp.zeros((ball_dim,), dtype=jnp.float32)
        else:
            self.xp = None
        self.curvature = curvature
        self.train_x = train_x

    def __call__(self, x):
        c = self.curvature
        shape = x.shape
        x2d = x.reshape(-1, shape[-1])
        if self.train_x:
            xp = _project(_expmap0(self.xp, c), c)
            out = logmap_pallas(xp, x2d, c)
        else:
            out = logmap0_pallas(x2d, c)
        return out.reshape(shape)


# -------------------------------- Reference -------------------------------- #
def _artanh_ref(z):
    z = jnp.clip(z, -1.0 + ARTANH_EPS, 1.0 - ARTANH_EPS)
    return 0.5 * (jnp.log1p(z) - jnp.log1p(-z))


def _logmap0_ref(x, c):
    sqrt_c = c ** 0.5
    norm = jnp.maximum(jnp.linalg.norm(x, axis=-1, keepdims=True), MIN_NORM)
    return _artanh_ref(sqrt_c * norm) * x / (sqrt_c * norm)


def _mobius_add_ref(x, y, c):
    x2 = jnp.sum(x * x, -1, keepdims=True)
    y2 = jnp.sum(y * y, -1, keepdims=True)
    xy = jnp.sum(x * y, -1, keepdims=True)
    num = (1 + 2 * c * xy + c * y2) * x + (1 - c * x2) * y
    denom = jnp.maximum(1 + 2 * c * xy + c * c * x2 * y2, MIN_NORM)
    return num / denom


def _logmap_ref(xp, x, c):
    sub = _mobius_add_ref(-xp, x, c)
    sub_norm = jnp.maximum(jnp.linalg.norm(sub, axis=-1, keepdims=True), MIN_NORM)
    lam = 2.0 / jnp.maximum(1.0 - c * jnp.sum(xp * xp, -1, keepdims=True), MIN_NORM)
    sqrt_c = c ** 0.5
    return 2.0 / (sqrt_c * lam) * _artanh_ref(sqrt_c * sub_norm) * sub / sub_norm


if __name__ == "__main__":
    key = jax.random.PRNGKey(0)
    k0, k1, k2 = jax.random.split(key, 3)
    curvature = 1.0
    # approx EUP reciprocals (~2^-12 rel err) limit accuracy; validate at 2e-3.
    TOL = dict(atol=2e-3, rtol=2e-3)

    # Packed path: D=32 (4 points per 128-lane row); N=199 exercises N % pack != 0 and the
    # ragged last row-tile (Pallas-masked, no wrapper row padding).
    N, D = 199, 32
    raw = jax.random.normal(k0, (N, D), dtype=jnp.float32)
    x = 0.4 * raw / (1.0 + jnp.linalg.norm(raw, axis=-1, keepdims=True))

    mod = FromPoincare(curvature=curvature, train_x=False)
    out = jax.block_until_ready(mod(x))
    assert out.shape == x.shape and out.dtype == x.dtype
    assert jnp.allclose(out, _logmap0_ref(x, curvature), **TOL)

    # train_x=True path (module init => xp = project(expmap0(zeros)))
    mod_tx = FromPoincare(curvature=curvature, train_x=True, ball_dim=D)
    out_tx = jax.block_until_ready(mod_tx(x))
    xp_ref = _project(_expmap0(jnp.zeros((D,), jnp.float32), curvature), curvature)
    assert jnp.allclose(out_tx, _logmap_ref(xp_ref.reshape(1, D), x, curvature), **TOL)

    # Non-trivial reference point exercises the full mobius_add / lambda_xp formula.
    xp_nz = (0.1 / (D ** 0.5)) * jnp.ones((D,), jnp.float32)
    out_nz = jax.block_until_ready(logmap_pallas(xp_nz, x, curvature))
    assert jnp.allclose(out_nz, _logmap_ref(xp_nz.reshape(1, D), x, curvature), **TOL)

    # D that does not divide 128: zero-padded to 64 lanes, routed through the packed kernel.
    N2, D2 = 64, 48
    raw2 = jax.random.normal(k1, (N2, D2), dtype=jnp.float32)
    x2 = 0.4 * raw2 / (1.0 + jnp.linalg.norm(raw2, axis=-1, keepdims=True))
    out2 = jax.block_until_ready(FromPoincare(curvature, train_x=False)(x2))
    assert jnp.allclose(out2, _logmap0_ref(x2, curvature), **TOL)
    xp2 = (0.1 / (D2 ** 0.5)) * jnp.ones((D2,), jnp.float32)
    out2_tx = jax.block_until_ready(logmap_pallas(xp2, x2, curvature))
    assert jnp.allclose(out2_tx, _logmap_ref(xp2.reshape(1, D2), x2, curvature), **TOL)

    # D > 128: lane-dense generic kernels (D padded to a multiple of 128).
    N3, D3 = 32, 160
    raw3 = jax.random.normal(k2, (N3, D3), dtype=jnp.float32)
    x3 = 0.4 * raw3 / (1.0 + jnp.linalg.norm(raw3, axis=-1, keepdims=True))
    out3 = jax.block_until_ready(FromPoincare(curvature, train_x=False)(x3))
    assert jnp.allclose(out3, _logmap0_ref(x3, curvature), **TOL)
    xp3 = (0.1 / (D3 ** 0.5)) * jnp.ones((D3,), jnp.float32)
    out3_tx = jax.block_until_ready(logmap_pallas(xp3, x3, curvature))
    assert jnp.allclose(out3_tx, _logmap_ref(xp3.reshape(1, D3), x3, curvature), **TOL)

    print("KERNEL_OK")
</pallas_src>

<mosaic_0001>
module attributes {stable_mosaic.version = 11 : i64} {
  func.func @_logmap0_packed_kernel(%arg0: i32, %arg1: memref<128x128xbf16, #tpu.memory_space<vmem>>, %arg2: memref<32x128xf32, #tpu.memory_space<vmem>>, %arg3: memref<32x128xf32, #tpu.memory_space<vmem>>) attributes {dimension_semantics = [#tpu.dimension_semantics<parallel>], iteration_bounds = array<i64: 2>, scalar_prefetch = 0 : i64, scratch_operands = 0 : i64, tpu.core_type = #tpu.core_type<tc>, window_params = [{pipeline_mode = #tpu.pipeline_mode<synchronous>, transform_indices = @transform_0, window_bounds = array<i64: 128, 128>}, {transform_indices = @transform_1, window_bounds = array<i64: 32, 128>}, {transform_indices = @transform_2, window_bounds = array<i64: 32, 128>}]} {
    %c0 = arith.constant 0 : index
    %c0_0 = arith.constant 0 : index
    %0 = vector.load %arg2[%c0, %c0_0] : memref<32x128xf32, #tpu.memory_space<vmem>>, vector<32x128xf32>
    %1 = arith.mulf %0, %0 : vector<32x128xf32>
    %c0_1 = arith.constant 0 : index
    %c0_2 = arith.constant 0 : index
    %2 = vector.load %arg1[%c0_1, %c0_2] : memref<128x128xbf16, #tpu.memory_space<vmem>>, vector<128x128xbf16>
    %3 = arith.truncf %1 : vector<32x128xf32> to vector<32x128xbf16>
    %4 = arith.extf %3 : vector<32x128xbf16> to vector<32x128xf32>
    %5 = arith.subf %1, %4 : vector<32x128xf32>
    %6 = arith.truncf %5 : vector<32x128xf32> to vector<32x128xbf16>
    %cst = arith.constant dense<0.000000e+00> : vector<32x128xf32>
    %7 = tpu.matmul %3, %2, %cst {dimension_numbers = #tpu.dot_dimension_numbers<[1], [0], [0], [1], [0, 0, 1, 1], [], []>} : vector<32x128xbf16>, vector<128x128xbf16>, vector<32x128xf32> -> vector<32x128xf32>
    %cst_3 = arith.constant dense<0.000000e+00> : vector<32x128xf32>
    %8 = tpu.matmul %6, %2, %cst_3 {dimension_numbers = #tpu.dot_dimension_numbers<[1], [0], [0], [1], [0, 0, 1, 1], [], []>} : vector<32x128xbf16>, vector<128x128xbf16>, vector<32x128xf32> -> vector<32x128xf32>
    %9 = arith.addf %7, %8 : vector<32x128xf32>
    %10 = math.sqrt %9 : vector<32x128xf32>
    %cst_4 = arith.constant 1.000000e-15 : f32
    %11 = vector.broadcast %cst_4 : f32 to vector<32x128xf32>
    %12 = arith.maximumf %10, %11 : vector<32x128xf32>
    %cst_5 = arith.constant 1.000000e+00 : f32
    %13 = vector.broadcast %cst_5 : f32 to vector<32x128xf32>
    %14 = arith.mulf %13, %12 : vector<32x128xf32>
    %cst_6 = arith.constant -0.999989986 : f32
    %cst_7 = arith.constant 0.999989986 : f32
    %15 = vector.broadcast %cst_6 : f32 to vector<32x128xf32>
    %16 = arith.maximumf %15, %14 : vector<32x128xf32>
    %17 = vector.broadcast %cst_7 : f32 to vector<32x128xf32>
    %18 = arith.minimumf %17, %16 : vector<32x128xf32>
    %cst_8 = arith.constant 2.000000e+00 : f32
    %19 = vector.broadcast %cst_8 : f32 to vector<32x128xf32>
    %20 = arith.mulf %19, %18 : vector<32x128xf32>
    %cst_9 = arith.constant 1.000000e+00 : f32
    %21 = vector.broadcast %cst_9 : f32 to vector<32x128xf32>
    %22 = arith.subf %21, %18 : vector<32x128xf32>
    %23 = tpu.reciprocal %22 {approx = true} : vector<32x128xf32> -> vector<32x128xf32>
    %24 = arith.mulf %20, %23 : vector<32x128xf32>
    %25 = math.log1p %24 : vector<32x128xf32>
    %cst_10 = arith.constant 5.000000e-01 : f32
    %26 = vector.broadcast %cst_10 : f32 to vector<32x128xf32>
    %27 = arith.mulf %26, %25 : vector<32x128xf32>
    %cst_11 = arith.constant 1.000000e+00 : f32
    %28 = vector.broadcast %cst_11 : f32 to vector<32x128xf32>
    %29 = arith.mulf %28, %12 : vector<32x128xf32>
    %30 = tpu.reciprocal %29 {approx = true} : vector<32x128xf32> -> vector<32x128xf32>
    %31 = arith.mulf %27, %30 : vector<32x128xf32>
    %32 = arith.mulf %0, %31 : vector<32x128xf32>
    %c0_12 = arith.constant 0 : index
    %c0_13 = arith.constant 0 : index
    %33 = vector.load %arg3[%c0_12, %c0_13] : memref<32x128xf32, #tpu.memory_space<vmem>>, vector<32x128xf32>
    tpu.vector_store %arg3[%c0_12, %c0_13], %32 {strides = array<i32>} : memref<32x128xf32, #tpu.memory_space<vmem>>, vector<32x128xf32>,
    return
  }
  func.func @transform_0(%arg0: i32) -> (i32, i32) {
    %c0_i32 = arith.constant 0 : i32
    %c0_i32_0 = arith.constant 0 : i32
    %c0_i32_1 = arith.constant 0 : i32
    return %c0_i32, %c0_i32_0 : i32, i32
  }
  func.func @transform_1(%arg0: i32) -> (i32, i32) {
    %c0_i32 = arith.constant 0 : i32
    %c0_i32_0 = arith.constant 0 : i32
    return %arg0, %c0_i32 : i32, i32
  }
  func.func @transform_2(%arg0: i32) -> (i32, i32) {
    %c0_i32 = arith.constant 0 : i32
    %c0_i32_0 = arith.constant 0 : i32
    return %arg0, %c0_i32 : i32, i32
  }
}

</mosaic_0001>

<llo_original>
// kernel: tpu_custom_call.1
$region0: #{tpu_custom_call.1}
  #allocation0 [shape = 'u32[]', space=smem, size = 0x4, offset = 0x4, fixed_abs, tag = 'smem constant byte address 0x4 - core index']
  #allocation1 [shape = 'u32[144,128]{1,0:T(1,128)}', space=vmem, size = 0x12000, scoped, tag = 'internal scratch']
  %s0 = inlined_call_operand.hbm [shape: bf16[128,128], index: 0, kind: input, shape index: {}]
  %s1 = inlined_call_operand.hbm [shape: f32[50,128], index: 1, kind: input, shape index: {}]
  %s2 = inlined_call_operand.hbm [shape: f32[50,128], index: 2, kind: output, shape index: {}]
  %s3 = sld [smem:[#allocation0]]
  $region49: #{tpu_custom_call.1} parent=0
    _
  %s5 = ssub.s32 1, %s3
  %s6 = scalar_select 0, %s5, %s3
  $region1: #{tpu_custom_call.1} parent=0
    #allocation2 [shape = 'u8[32768]{0}', space=vmem, size = 0x8000, scoped, tag = 'input window, operand 0, single buffered']
    #allocation3 [shape = 's32[2]{0}', space=sflag, size = 0x8, scoped, tag = 'scoped memory for tpu_custom_call.1']
    #allocation4 [shape = 's32[2]{0}', space=sflag, size = 0x8, scoped, tag = 'scoped memory for tpu_custom_call.1']
    #allocation5 [shape = 'u8[32768]{0}', space=vmem, size = 0x8000, scoped, tag = 'input window, operand 1']
    #allocation6 [shape = 's32[2]{0}', space=sflag, size = 0x8, scoped, tag = 'scoped memory for tpu_custom_call.1']
    #allocation7 [shape = 'u8[32768]{0}', space=vmem, size = 0x8000, scoped, tag = 'output window, operand 0']
    %7 = vsyncpa [#allocation3], 0
    %8 = vsyncpa [#allocation6], 0
    %s9 = scalar_lea.sflag [#allocation6], 1
    %10 = vsyncpa %s9, 0
    %11 = vsyncpa [#allocation4], 0
    %s12 = scalar_lea.sflag [#allocation4], 1
    %13 = vsyncpa %s12, 0
    loop: start=0, step=1, limit=4
    $region2: #{tpu_custom_call.1} parent=1 // loop_pre_header
      _
    $region3: #{tpu_custom_call.1} parent=1 // loop_header
      %s15 = sphi 0, %s19
      %p16 = scmp.ge.s32.totalorder %s15, 4
      %s23 = sphi 0, %s23
      %s25 = sphi 0, %s23
      %s26 = sphi 0, %s25
      %s40 = sphi 0, %s26
      %s46 = sphi 0, %s48
      %s49 = sphi 0, %s46
      %s50 = sphi 0, %s49
      %s66 = sphi 0, %s50
      %s72 = sphi 0, %s74
      %s75 = sphi 0, %s72
      %s76 = sphi 0, %s75
      %s92 = sphi 0, %s76
    $region4: #{tpu_custom_call.1} parent=1 // loop_header_branch
      %18 = sbr.rel (%p16) target = $region8
    $region5: #{tpu_custom_call.1} parent=1 // loop_body
      %s20 = ssub.s32 %s15, 1
      %s21 = ssub.s32 %s15, 2
      %s22 = sadd.s32 %s15, 1
      %s24 = sadd.s32 %s23, 1
      %p27 = scmp.eq.s32.totalorder %s15, 1
      %p28 = scmp.ne.s32.totalorder %s23, %s25
      %p29 = scmp.eq.s32.totalorder %s15, 0
      %p30 = por %p28, %p29
      %p31 = scmp.ne.s32.totalorder %s23, %s25
      %p32 = scmp.eq.s32.totalorder %s20, 1
      %p33 = por %p31, %p32
      %p34 = scmp.ne.s32.totalorder %s25, %s26
      %p35 = scmp.eq.s32.totalorder %s20, 0
      %p36 = por %p34, %p35
      %p37 = scmp.ne.s32.totalorder %s25, %s26
      %p38 = scmp.eq.s32.totalorder %s21, 1
      %p39 = por %p37, %p38
      %p41 = scmp.ne.s32.totalorder %s26, %s40
      %p42 = scmp.eq.s32.totalorder %s21, 0
      %p43 = por %p41, %p42
      %s44 = ssub.s32 %s15, %s22
      %p45 = scmp.eq.s32.totalorder %s44, 0
      %s47 = sadd.s32 %s46, 1
      %s48 = scalar_select %p45, %s46, %s47
      %p51 = pneg %p45
      %p52 = scmp.eq.s32.totalorder %s15, 1
      %p53 = por %p51, %p52
      %p54 = scmp.ne.s32.totalorder %s46, %s49
      %p55 = scmp.eq.s32.totalorder %s15, 0
      %p56 = por %p54, %p55
      %p57 = scmp.ne.s32.totalorder %s46, %s49
      %p58 = scmp.eq.s32.totalorder %s20, 1
      %p59 = por %p57, %p58
      %p60 = scmp.ne.s32.totalorder %s49, %s50
      %p61 = scmp.eq.s32.totalorder %s20, 0
      %p62 = por %p60, %p61
      %p63 = scmp.ne.s32.totalorder %s49, %s50
      %p64 = scmp.eq.s32.totalorder %s21, 1
      %p65 = por %p63, %p64
      %p67 = scmp.ne.s32.totalorder %s50, %s66
      %p68 = scmp.eq.s32.totalorder %s21, 0
      %p69 = por %p67, %p68
      %s70 = ssub.s32 %s15, %s22
      %p71 = scmp.eq.s32.totalorder %s70, 0
      %s73 = sadd.s32 %s72, 1
      %s74 = scalar_select %p71, %s72, %s73
      %p77 = pneg %p71
      %p78 = scmp.eq.s32.totalorder %s15, 1
      %p79 = por %p77, %p78
      %p80 = scmp.ne.s32.totalorder %s72, %s75
      %p81 = scmp.eq.s32.totalorder %s15, 0
      %p82 = por %p80, %p81
      %p83 = scmp.ne.s32.totalorder %s72, %s75
      %p84 = scmp.eq.s32.totalorder %s20, 1
      %p85 = por %p83, %p84
      %p86 = scmp.ne.s32.totalorder %s75, %s76
      %p87 = scmp.eq.s32.totalorder %s20, 0
      %p88 = por %p86, %p87
      %p89 = scmp.ne.s32.totalorder %s75, %s76
      %p90 = scmp.eq.s32.totalorder %s21, 1
      %p91 = por %p89, %p90
      %p93 = scmp.ne.s32.totalorder %s76, %s92
      %p94 = scmp.eq.s32.totalorder %s21, 0
      %p95 = por %p93, %p94
      %p96 = scmp.le.s32.totalorder 1, %s15
      %p97 = scmp.lt.s32.totalorder %s15, 3
      %p98 = pnand %p96, %p97
      %p99 = pneg %p98
      // Predicated region
      $region9: #{tpu_custom_call.1} parent=5 // pred_check
        _
      $region10: #{tpu_custom_call.1} parent=5 // pred_check_branch
        %101 = sbr.rel (%p98) target = $region12
      $region11: #{tpu_custom_call.1} parent=5 // pred_region
        %s102 = ssub.s32 %s15, 1
        // Predicated region
        $region13: #{tpu_custom_call.1} parent=11 // pred_check
          %p103 = pneg %p36
        $region14: #{tpu_custom_call.1} parent=11 // pred_check_branch
          %105 = sbr.rel (%p103) target = $region16
        $region15: #{tpu_custom_call.1} parent=11 // pred_region
          %s107 = ssub.s32 1024, 1024
          %108 = vsyncadd [#allocation3], %s107
          %s109 = sshll.u32 [#allocation2], 4
          %s110 = int_to_ptr.vmem [resolvable:$true] %s109
          %115 = dma.hbm_to_vmem [thread:$0]  %s0, 1024, %s110, [#allocation3], 64, 64, 4
        $region16: #{tpu_custom_call.1} parent=11 // pred_fallthru
          _
      $region12: #{tpu_custom_call.1} parent=5 // pred_fallthru
        _
      %p116 = scmp.lt.s32.totalorder %s15, 2
      // Predicated region
      $region17: #{tpu_custom_call.1} parent=5 // pred_check
        %p117 = pneg %p116
      $region18: #{tpu_custom_call.1} parent=5 // pred_check_branch
        %119 = sbr.rel (%p117) target = $region20
      $region19: #{tpu_custom_call.1} parent=5 // pred_region
        // Predicated region
        $region21: #{tpu_custom_call.1} parent=19 // pred_check
          %p120 = pneg %p56
        $region22: #{tpu_custom_call.1} parent=19 // pred_check_branch
          %122 = sbr.rel (%p120) target = $region24
        $region23: #{tpu_custom_call.1} parent=19 // pred_region
          %s123 = sand.u32 %s46, 1
          %s124 = scalar_lea.sflag [#allocation6], %s123
          %s125 = sand.u32 %s46, 1
          %s126 = smul.addr %s125, 32
          %s127 = scalar_lea.vmem [#allocation5], %s126
          %s128 = smul.u32 4, %s15
          %s129 = ssub.s32 7, %s128
          %p130 = scmp.lt.s32.totalorder %s129, 4
          %s131 = scalar_select %p130, %s129, 4
          %s132 = smul.u32 128, %s131
          %s134 = ssub.s32 512, %s132
          %135 = vsyncadd %s124, %s134
          %p136 = scmp.ne.s32.totalorder 0, %s132
          %s137 = smul.addr %s128, 128
          %s138 = scalar_lea.hbm %s1, %s137
          %s139 = smul.u32 8, %s131
          %s140 = sshll.u32 %s127, 4
          %s141 = int_to_ptr.vmem [resolvable:$true] %s140
          %s142 = sshll.u32 %s139, 4
          %146 = dma.hbm_to_vmem [thread:$0]  (%p136), %s138, %s142, %s141, %s124, 128, 128, 8
        $region24: #{tpu_custom_call.1} parent=19 // pred_fallthru
          _
      $region20: #{tpu_custom_call.1} parent=5 // pred_fallthru
        _
      %p147 = scmp.le.s32.totalorder 1, %s15
      %p148 = scmp.lt.s32.totalorder %s15, 3
      %p149 = pnand %p147, %p148
      %p150 = pneg %p149
      // Predicated region
      $region25: #{tpu_custom_call.1} parent=5 // pred_check
        _
      $region26: #{tpu_custom_call.1} parent=5 // pred_check_branch
        %152 = sbr.rel (%p149) target = $region28
      $region27: #{tpu_custom_call.1} parent=5 // pred_region
        %s153 = ssub.s32 %s15, 1
        // Predicated region
        $region29: #{tpu_custom_call.1} parent=27 // pred_check
          %p154 = pneg %p36
        $region30: #{tpu_custom_call.1} parent=27 // pred_check_branch
          %156 = sbr.rel (%p154) target = $region32
        $region31: #{tpu_custom_call.1} parent=27 // pred_region
          %157 = dma.done [#allocation3], 1024
        $region32: #{tpu_custom_call.1} parent=27 // pred_fallthru
          _
        %s158 = sand.u32 %s49, 1
        %s159 = scalar_lea.sflag [#allocation6], %s158
        %s160 = sand.u32 %s49, 1
        %s161 = smul.addr %s160, 32
        %s162 = scalar_lea.vmem [#allocation5], %s161
        // Predicated region
        $region33: #{tpu_custom_call.1} parent=27 // pred_check
          %p163 = pneg %p62
        $region34: #{tpu_custom_call.1} parent=27 // pred_check_branch
          %165 = sbr.rel (%p163) target = $region36
        $region35: #{tpu_custom_call.1} parent=27 // pred_region
          %166 = dma.done %s159, 512
        $region36: #{tpu_custom_call.1} parent=27 // pred_fallthru
          _
        %p167 = pneg %p36
        %p168 = pneg %p33
        %s169 = sand.u32 %s49, 1
        %s170 = scalar_lea.sflag [#allocation6], %s169
        %s171 = sand.u32 %s49, 1
        %s172 = smul.addr %s171, 32
        %s173 = scalar_lea.vmem [#allocation5], %s172
        %p174 = pneg %p62
        %p175 = pneg %p59
        %p176 = pneg %p88
        %p177 = pneg %p85
        %s178 = sand.u32 %s75, 1
        %s179 = scalar_lea.sflag [#allocation4], %s178
        %s180 = sand.u32 %s75, 1
        %s181 = smul.addr %s180, 32
        %s182 = scalar_lea.vmem [#allocation7], %s181
        %s183 = smul.u32 4, %s20
        %s184 = ssub.s32 7, %s183
        %p185 = scmp.lt.s32.totalorder %s184, 4
        %s186 = scalar_select %p185, %s184, 4
        %s187 = smul.u32 128, %s186
        %s188 = smul.u32 4, %s20
        %s189 = ssub.s32 7, %s188
        %p190 = scmp.lt.s32.totalorder %s189, 4
        %s191 = scalar_select %p190, %s189, 4
        %s192 = smul.u32 128, %s191
        %v194 = vld [vmem:[%s162] sm:$0xff]
        %v195 = vld [vmem:[%s162 + $0x8] sm:$0xff]
        %v196 = vld [vmem:[%s162 + $0x10] sm:$0xff]
        %v197 = vld [vmem:[%s162 + $0x18] sm:$0xff]
        %v198 = vmul.f32 %v194, %v194
        %v199 = vmul.f32 %v195, %v195
        %v200 = vmul.f32 %v196, %v196
        %v201 = vmul.f32 %v197, %v197
        %v202 = vld [vmem:[#allocation2] sm:$0xf]
        %v203 = vld [vmem:[#allocation2 + $0x4] sm:$0xf]
        %v204 = vld [vmem:[#allocation2 + $0x8] sm:$0xf]
        %v205 = vld [vmem:[#allocation2 + $0xc] sm:$0xf]
        %v206 = vld [vmem:[#allocation2 + $0x10] sm:$0xf]
        %v207 = vld [vmem:[#allocation2 + $0x14] sm:$0xf]
        %v208 = vld [vmem:[#allocation2 + $0x18] sm:$0xf]
        %v209 = vld [vmem:[#allocation2 + $0x1c] sm:$0xf]
        %v210 = vld [vmem:[#allocation2 + $0x20] sm:$0xf]
        %v211 = vld [vmem:[#allocation2 + $0x24] sm:$0xf]
        %v212 = vld [vmem:[#allocation2 + $0x28] sm:$0xf]
        %v213 = vld [vmem:[#allocation2 + $0x2c] sm:$0xf]
        %v214 = vld [vmem:[#allocation2 + $0x30] sm:$0xf]
        %v215 = vld [vmem:[#allocation2 + $0x34] sm:$0xf]
        %v216 = vld [vmem:[#allocation2 + $0x38] sm:$0xf]
        %v217 = vld [vmem:[#allocation2 + $0x3c] sm:$0xf]
        %v218 = vpack.c.bf16 %v199, %v198
        %v219 = vpack.c.bf16 %v201, %v200
        %v220 = vunpack.c.l.bf16 %v218
        %v221 = vunpack.c.h.bf16 %v218
        %v222 = vunpack.c.l.bf16 %v219
        %v223 = vunpack.c.h.bf16 %v219
        %v224 = vsub.f32 %v198, %v220
        %v225 = vsub.f32 %v199, %v221
        %v226 = vsub.f32 %v200, %v222
        %v227 = vsub.f32 %v201, %v223
        %v228 = vpack.c.bf16 %v225, %v224
        %v229 = vpack.c.bf16 %v227, %v226
        %v246 = vunpack.c.l.b16 %v202
        %v247 = vunpack.c.l.b16 %v203
        %v248 = vunpack.c.l.b16 %v204
        %v249 = vunpack.c.l.b16 %v205
        %v250 = vunpack.c.l.b16 %v206
        %v251 = vunpack.c.l.b16 %v207
        %v252 = vunpack.c.l.b16 %v208
        %v253 = vunpack.c.l.b16 %v209
        %v254 = vunpack.c.l.b16 %v210
        %v255 = vunpack.c.l.b16 %v211
        %v256 = vunpack.c.l.b16 %v212
        %v257 = vunpack.c.l.b16 %v213
        %v258 = vunpack.c.l.b16 %v214
        %v259 = vunpack.c.l.b16 %v215
        %v260 = vunpack.c.l.b16 %v216
        %v261 = vunpack.c.l.b16 %v217
        %v262 = vpack.c.b16 %v247, %v246
        %v263 = vpack.c.b16 %v249, %v248
        %v264 = vpack.c.b16 %v251, %v250
        %v265 = vpack.c.b16 %v253, %v252
        %v266 = vpack.c.b16 %v255, %v254
        %v267 = vpack.c.b16 %v257, %v256
        %v268 = vpack.c.b16 %v259, %v258
        %v269 = vpack.c.b16 %v261, %v260
        %278 = vmatprep.subr.bf16.mxu0 0
        %279 = vmatpush1.bf16.msra.mxu0 %v262
        %280 = vmatprep.subr.bf16.mxu0 0
        %281 = vmatpush1.bf16.msra.mxu0 %v263
        %282 = vmatprep.subr.bf16.mxu0 0
        %283 = vmatpush1.bf16.msra.mxu0 %v264
        %284 = vmatprep.subr.bf16.mxu0 0
        %285 = vmatpush1.bf16.msra.mxu0 %v265
        %286 = vmatprep.subr.bf16.mxu0 0
        %287 = vmatpush1.bf16.msra.mxu0 %v266
        %288 = vmatprep.subr.bf16.mxu0 0
        %289 = vmatpush1.bf16.msra.mxu0 %v267
        %290 = vmatprep.subr.bf16.mxu0 0
        %291 = vmatpush1.bf16.msra.mxu0 %v268
        %292 = vmatprep.subr.bf16.mxu0 0
        %293 = vmatpush1.bf16.msra.mxu0 %v269
        %294 = vmatprep.subr.bf16.mxu0 0
        %295 = vmatpush1.bf16.msra.mxu0 0
        %296 = vmatprep.subr.bf16.mxu0 0
        %297 = vmatpush1.bf16.msra.mxu0 0
        %298 = vmatprep.subr.bf16.mxu0 0
        %299 = vmatpush1.bf16.msra.mxu0 0
        %300 = vmatprep.subr.bf16.mxu0 0
        %301 = vmatpush1.bf16.msra.mxu0 0
        %302 = vmatprep.subr.bf16.mxu0 0
        %303 = vmatpush1.bf16.msra.mxu0 0
        %304 = vmatprep.subr.bf16.mxu0 0
        %305 = vmatpush1.bf16.msra.mxu0 0
        %306 = vmatprep.subr.bf16.mxu0 0
        %307 = vmatpush1.bf16.msra.mxu0 0
        %308 = vmatprep.subr.bf16.mxu0 0
        %309 = vmatpush1.bf16.msra.mxu0 0
        %310 = vmatprep.mubr.bf16.mxu0 0
        %311 = vmatmul.mubr.bf16.gmra.mrb[0].mxu0 %v228
        %v312 = vpop.f32.mrb[0].mxu0
        %v313 = vadd.f32 0.0, %v312
        %v314 = vpop.f32.mrb[0].mxu0
        %v315 = vpop.f32.mrb[0].mxu0
        %v316 = vadd.f32 0.0, %v315
        %v317 = vpop.f32.mrb[0].mxu0
        %318 = vmatprep.mubr.bf16.mxu0 0
        %319 = vmatmul.mubr.bf16.gmra.mrb[0].mxu0 %v229
        %v320 = vpop.f32.mrb[0].mxu0
        %v321 = vadd.f32 0.0, %v320
        %v322 = vpop.f32.mrb[0].mxu0
        %v323 = vpop.f32.mrb[0].mxu0
        %v324 = vadd.f32 0.0, %v323
        %v325 = vpop.f32.mrb[0].mxu0
        %326 = vdwg.mxu0
        %327 = vmatprep.subr.bf16.mxu0 0
        %328 = vmatpush1.bf16.msra.mxu0 %v262
        %329 = vmatprep.subr.bf16.mxu0 0
        %330 = vmatpush1.bf16.msra.mxu0 %v263
        %331 = vmatprep.subr.bf16.mxu0 0
        %332 = vmatpush1.bf16.msra.mxu0 %v264
        %333 = vmatprep.subr.bf16.mxu0 0
        %334 = vmatpush1.bf16.msra.mxu0 %v265
        %335 = vmatprep.subr.bf16.mxu0 0
        %336 = vmatpush1.bf16.msra.mxu0 %v266
        %337 = vmatprep.subr.bf16.mxu0 0
        %338 = vmatpush1.bf16.msra.mxu0 %v267
        %339 = vmatprep.subr.bf16.mxu0 0
        %340 = vmatpush1.bf16.msra.mxu0 %v268
        %341 = vmatprep.subr.bf16.mxu0 0
        %342 = vmatpush1.bf16.msra.mxu0 %v269
        %343 = vmatprep.subr.bf16.mxu0 0
        %344 = vmatpush1.bf16.msra.mxu0 0
        %345 = vmatprep.subr.bf16.mxu0 0
        %346 = vmatpush1.bf16.msra.mxu0 0
        %347 = vmatprep.subr.bf16.mxu0 0
        %348 = vmatpush1.bf16.msra.mxu0 0
        %349 = vmatprep.subr.bf16.mxu0 0
        %350 = vmatpush1.bf16.msra.mxu0 0
        %351 = vmatprep.subr.bf16.mxu0 0
        %352 = vmatpush1.bf16.msra.mxu0 0
        %353 = vmatprep.subr.bf16.mxu0 0
        %354 = vmatpush1.bf16.msra.mxu0 0
        %355 = vmatprep.subr.bf16.mxu0 0
        %356 = vmatpush1.bf16.msra.mxu0 0
        %357 = vmatprep.subr.bf16.mxu0 0
        %358 = vmatpush1.bf16.msra.mxu0 0
        %359 = vmatprep.mubr.bf16.mxu0 0
        %360 = vmatmul.mubr.bf16.gmra.mrb[0].mxu0 %v218
        %v361 = vpop.f32.mrb[0].mxu0
        %v362 = vadd.f32 %v313, %v361
        %v363 = vpop.f32.mrb[0].mxu0
        %v364 = vpop.f32.mrb[0].mxu0
        %v365 = vadd.f32 %v316, %v364
        %v366 = vpop.f32.mrb[0].mxu0
        %367 = vmatprep.mubr.bf16.mxu0 0
        %368 = vmatmul.mubr.bf16.gmra.mrb[0].mxu0 %v219
        %v369 = vpop.f32.mrb[0].mxu0
        %v370 = vadd.f32 %v321, %v369
        %v371 = vpop.f32.mrb[0].mxu0
        %v372 = vpop.f32.mrb[0].mxu0
        %v373 = vadd.f32 %v324, %v372
        %v374 = vpop.f32.mrb[0].mxu0
        %375 = vdwg.mxu0
        %v376 = vrsqrt.pop %v362
        %v377 = vmul.f32 %v362, %v376
        %vm378 = vcmp.eq.f32.partialorder %v362, inf
        %v379 = vsel %vm378, %v362, %v377
        %vm380 = vcmp.eq.f32.partialorder %v362, 0.0
        %v381 = vand.u32 %v362, 2147483648
        %v382 = vsel %vm380, %v381, %v379
        %v383 = vrsqrt.pop %v365
        %v384 = vmul.f32 %v365, %v383
        %vm385 = vcmp.eq.f32.partialorder %v365, inf
        %v386 = vsel %vm385, %v365, %v384
        %vm387 = vcmp.eq.f32.partialorder %v365, 0.0
        %v388 = vand.u32 %v365, 2147483648
        %v389 = vsel %vm387, %v388, %v386
        %v390 = vrsqrt.pop %v370
        %v391 = vmul.f32 %v370, %v390
        %vm392 = vcmp.eq.f32.partialorder %v370, inf
        %v393 = vsel %vm392, %v370, %v391
        %vm394 = vcmp.eq.f32.partialorder %v370, 0.0
        %v395 = vand.u32 %v370, 2147483648
        %v396 = vsel %vm394, %v395, %v393
        %v397 = vrsqrt.pop %v373
        %v398 = vmul.f32 %v373, %v397
        %vm399 = vcmp.eq.f32.partialorder %v373, inf
        %v400 = vsel %vm399, %v373, %v398
        %vm401 = vcmp.eq.f32.partialorder %v373, 0.0
        %v402 = vand.u32 %v373, 2147483648
        %v403 = vsel %vm401, %v402, %v400
        %v404 = vmax.f32 %v382, 1e-15
        %v405 = vmax.f32 %v389, 1e-15
        %v406 = vmax.f32 %v396, 1e-15
        %v407 = vmax.f32 %v403, 1e-15
        %v408 = vmax.f32 %v404, -0.99999
        %v409 = vmax.f32 %v405, -0.99999
        %v410 = vmax.f32 %v406, -0.99999
        %v411 = vmax.f32 %v407, -0.99999
        %v412 = vmin.f32 %v408, 0.99999
        %v413 = vmin.f32 %v409, 0.99999
        %v414 = vmin.f32 %v410, 0.99999
        %v415 = vmin.f32 %v411, 0.99999
        %v416 = vmul.f32 %v412, 2.0
        %v417 = vmul.f32 %v413, 2.0
        %v418 = vmul.f32 %v414, 2.0
        %v419 = vmul.f32 %v415, 2.0
        %v420 = vsub.f32 1.0, %v412
        %v421 = vsub.f32 1.0, %v413
        %v422 = vsub.f32 1.0, %v414
        %v423 = vsub.f32 1.0, %v415
        %v424 = vrcp.pop %v420
        %v425 = vrcp.pop %v421
        %v426 = vrcp.pop %v422
        %v427 = vrcp.pop %v423
        %v428 = vmul.f32 %v416, %v424
        %v429 = vmul.f32 %v417, %v425
        %v430 = vmul.f32 %v418, %v426
        %v431 = vmul.f32 %v419, %v427
        %v432 = vadd.f32 %v428, 1.0
        %v433 = vlog2.pop %v432
        %v434 = vmul.f32 %v433, 0.6931472
        %v435 = vmul.f32 -0.5, %v428
        %v436 = vadd.f32 %v435, 1.0
        %v437 = vmul.f32 %v436, %v428
        %v438 = vand.u32 2147483647, %v428
        %vm439 = vcmp.lt.f32.partialorder %v438, 0.0004427343
        %v440 = vsel %vm439, %v437, %v434
        %v441 = vadd.f32 %v429, 1.0
        %v442 = vlog2.pop %v441
        %v443 = vmul.f32 %v442, 0.6931472
        %v444 = vmul.f32 -0.5, %v429
        %v445 = vadd.f32 %v444, 1.0
        %v446 = vmul.f32 %v445, %v429
        %v447 = vand.u32 2147483647, %v429
        %vm448 = vcmp.lt.f32.partialorder %v447, 0.0004427343
        %v449 = vsel %vm448, %v446, %v443
        %v450 = vadd.f32 %v430, 1.0
        %v451 = vlog2.pop %v450
        %v452 = vmul.f32 %v451, 0.6931472
        %v453 = vmul.f32 -0.5, %v430
        %v454 = vadd.f32 %v453, 1.0
        %v455 = vmul.f32 %v454, %v430
        %v456 = vand.u32 2147483647, %v430
        %vm457 = vcmp.lt.f32.partialorder %v456, 0.0004427343
        %v458 = vsel %vm457, %v455, %v452
        %v459 = vadd.f32 %v431, 1.0
        %v460 = vlog2.pop %v459
        %v461 = vmul.f32 %v460, 0.6931472
        %v462 = vmul.f32 -0.5, %v431
        %v463 = vadd.f32 %v462, 1.0
        %v464 = vmul.f32 %v463, %v431
        %v465 = vand.u32 2147483647, %v431
        %vm466 = vcmp.lt.f32.partialorder %v465, 0.0004427343
        %v467 = vsel %vm466, %v464, %v461
        %v468 = vmul.f32 %v440, 0.5
        %v469 = vmul.f32 %v449, 0.5
        %v470 = vmul.f32 %v458, 0.5
        %v471 = vmul.f32 %v467, 0.5
        %v472 = vrcp.pop %v404
        %v473 = vrcp.pop %v405
        %v474 = vrcp.pop %v406
        %v475 = vrcp.pop %v407
        %v476 = vmul.f32 %v468, %v472
        %v477 = vmul.f32 %v469, %v473
        %v478 = vmul.f32 %v470, %v474
        %v479 = vmul.f32 %v471, %v475
        %v480 = vmul.f32 %v194, %v476
        %v481 = vmul.f32 %v195, %v477
        %v482 = vmul.f32 %v196, %v478
        %v483 = vmul.f32 %v197, %v479
        %484 = vst [vmem:[%s182] sm:$0xff] %v480
        %485 = vst [vmem:[%s182 + $0x8] sm:$0xff] %v481
        %486 = vst [vmem:[%s182 + $0x10] sm:$0xff] %v482
        %487 = vst [vmem:[%s182 + $0x18] sm:$0xff] %v483
        %s488 = sand.u32 %s75, 1
        %s489 = scalar_lea.sflag [#allocation4], %s488
        %s490 = sand.u32 %s75, 1
        %s491 = smul.addr %s490, 32
        %s492 = scalar_lea.vmem [#allocation7], %s491
        // Predicated region
        $region37: #{tpu_custom_call.1} parent=27 // pred_check
          %p493 = pneg %p85
        $region38: #{tpu_custom_call.1} parent=27 // pred_check_branch
          %495 = sbr.rel (%p493) target = $region40
        $region39: #{tpu_custom_call.1} parent=27 // pred_region
          %s496 = smul.u32 4, %s20
          %s497 = ssub.s32 7, %s496
          %p498 = scmp.lt.s32.totalorder %s497, 4
          %s499 = scalar_select %p498, %s497, 4
          %s500 = smul.u32 128, %s499
          %s502 = ssub.s32 512, %s500
          %503 = vsyncadd %s489, %s502
          %p504 = scmp.ne.s32.totalorder 0, %s500
          %s505 = smul.addr %s496, 128
          %s506 = scalar_lea.hbm %s2, %s505
          %s507 = smul.u32 8, %s499
          %s508 = sshll.u32 %s492, 4
          %s509 = int_to_ptr.vmem [resolvable:$true] %s508
          %s510 = sshll.u32 %s507, 4
          %514 = dma.vmem_to_hbm [thread:$0]  (%p504), %s509, %s510, %s506, %s489, 128, 128, 8
        $region40: #{tpu_custom_call.1} parent=27 // pred_fallthru
          _
      $region28: #{tpu_custom_call.1} parent=5 // pred_fallthru
        _
      %p515 = scmp.le.s32.totalorder 2, %s15
      // Predicated region
      $region41: #{tpu_custom_call.1} parent=5 // pred_check
        %p516 = pneg %p515
      $region42: #{tpu_custom_call.1} parent=5 // pred_check_branch
        %518 = sbr.rel (%p516) target = $region44
      $region43: #{tpu_custom_call.1} parent=5 // pred_region
        %s519 = ssub.s32 %s15, 2
        // Predicated region
        $region45: #{tpu_custom_call.1} parent=43 // pred_check
          %p520 = pneg %p91
        $region46: #{tpu_custom_call.1} parent=43 // pred_check_branch
          %522 = sbr.rel (%p520) target = $region48
        $region47: #{tpu_custom_call.1} parent=43 // pred_region
          %s523 = sand.u32 %s76, 1
          %s524 = scalar_lea.sflag [#allocation4], %s523
          %s525 = sand.u32 %s76, 1
          %s526 = smul.addr %s525, 32
          %s527 = scalar_lea.vmem [#allocation7], %s526
          %528 = dma.done %s524, 512
        $region48: #{tpu_custom_call.1} parent=43 // pred_fallthru
          _
      $region44: #{tpu_custom_call.1} parent=5 // pred_fallthru
        _
    $region6: #{tpu_custom_call.1} parent=1 // loop_footer
      %s19 = sadd.s32 1, %s15
    $region7: #{tpu_custom_call.1} parent=1 // loop_footer_branch
      %14 = sbr.rel target = $region3
    $region8: #{tpu_custom_call.1} parent=1 // loop_exit
      _
    %529 = vsyncpa [#allocation3], 1
    %s530 = scalar_lea.sflag [#allocation3], 1
    %531 = vsyncpa %s530, 1
    %532 = vsyncpa [#allocation6], 1
    %s533 = scalar_lea.sflag [#allocation6], 1
    %534 = vsyncpa %s533, 1
    %535 = vsyncpa [#allocation4], 1
    %s536 = scalar_lea.sflag [#allocation4], 1
    %537 = vsyncpa %s536, 1

</llo_original>
